<compile_context>
chip_gen: v5e
topology: v5e:2x2
jax: 0.10.0
libtpu: 0.0.40
codegen_flags: <defaults>
</compile_context>

<pallas_src>
import functools

import jax
import jax.numpy as jnp
from jax import lax
from jax.experimental import pallas as pl
from jax.experimental.pallas import tpu as pltpu

_LANE = 128


def _round_up(x, m):
    return ((x + m - 1) // m) * m


# ---------------------------------------------------------------------------
# Kernel: whole actor-critic forward for one batch tile, fully lane-dense.
# ---------------------------------------------------------------------------
def _fused_kernel(action_dim, x_ref, w1_ref, w2_ref, w3_ref, b_ref, out_ref):
    # bf16 operands into the MXU; f32 accumulation via preferred_element_type.
    x = x_ref[...].astype(jnp.bfloat16)          # [TILE_B, D]
    b = b_ref[...]                               # [3, WF]  f32

    # Layers 1 & 2 of BOTH nets at once (policy lanes [0:HP), value [HP:HP+HV)).
    h = jnp.tanh(jnp.dot(x, w1_ref[...], preferred_element_type=jnp.float32)
                 + b[0:1, :])
    h = jnp.tanh(jnp.dot(h.astype(jnp.bfloat16), w2_ref[...],
                         preferred_element_type=jnp.float32) + b[1:2, :])

    # Fused heads: lanes [0:2A) = policy logits, lane 2A = value, rest zero pad.
    z = jnp.dot(h.astype(jnp.bfloat16), w3_ref[...],
                preferred_element_type=jnp.float32) + b[2:3, :]

    # get_dist (Box): std = softplus(std_logit) + 0.05, applied lane-dense via a
    # lane-index select (no sub-128-lane slicing inside the kernel).
    lane = lax.broadcasted_iota(jnp.int32, z.shape, dimension=1)
    is_std = jnp.logical_and(lane >= action_dim, lane < 2 * action_dim)
    # numerically-stable softplus: max(x,0) + log1p(exp(-|x|))
    softplus = jnp.maximum(z, 0.0) + jnp.log1p(jnp.exp(-jnp.abs(z)))
    out_ref[...] = jnp.where(is_std, softplus + 0.05, z)


# ---------------------------------------------------------------------------
# Wrapper
# ---------------------------------------------------------------------------
def separate_feature_network_forward(state, fused, action_dim, tile_b=2048):
    """Single-slab Pallas forward. Returns (mean, std, value)."""
    B, D = state.shape
    WF = fused["W1"].shape[1]
    A = action_dim

    # Batch tile: multiple of 8 sublanes, <= tile_b, <= 8192 (VMEM headroom on v7x).
    TILE_B = _round_up(min(int(tile_b), 8192, max(B, 8)), 8)
    if B > 8:
        # Ensure >= 2 grid steps whenever the batch can be split, so v7x's two
        # TensorCores both get work from the "parallel" grid axis.
        TILE_B = max(8, min(TILE_B, _round_up(pl.cdiv(B, 2), 8)))
    grid = (pl.cdiv(B, TILE_B),)    # ragged final block handled by Pallas (no jnp.pad)

    kernel = functools.partial(_fused_kernel, A)

    weight_bytes = sum(int(a.size) * a.dtype.itemsize
                       for a in (fused["W1"], fused["W2"], fused["W3"], fused["B"]))
    cost = pl.CostEstimate(
        flops=2 * B * (D * WF + 2 * WF * WF),
        transcendentals=4 * B * WF,                              # 2x tanh + exp + log1p
        bytes_accessed=B * (D * state.dtype.itemsize + WF * 4) + weight_bytes,
    )

    slab = pl.pallas_call(
        kernel,
        out_shape=jax.ShapeDtypeStruct((B, WF), jnp.float32),
        grid=grid,
        in_specs=[
            pl.BlockSpec((TILE_B, D), lambda i: (i, 0)),   # state tile
            pl.BlockSpec((D, WF), lambda i: (0, 0)),       # W1 fused (resident, bf16)
            pl.BlockSpec((WF, WF), lambda i: (0, 0)),      # W2 block-diag (bf16)
            pl.BlockSpec((WF, WF), lambda i: (0, 0)),      # W3 fused heads (bf16)
            pl.BlockSpec((3, WF), lambda i: (0, 0)),       # packed biases (f32)
        ],
        out_specs=pl.BlockSpec((TILE_B, WF), lambda i: (i, 0)),
        compiler_params=pltpu.CompilerParams(
            dimension_semantics=("parallel",)),
        cost_estimate=cost,
    )(state, fused["W1"], fused["W2"], fused["W3"], fused["B"])

    # Free XLA slices of the lane-dense slab.
    mean = slab[:, :A]
    std = slab[:, A:2 * A]
    value = slab[:, 2 * A:2 * A + 1]
    return mean, std, value


# ---------------------------------------------------------------------------
# Parameter construction (matches torch layer_init) + fusion
# ---------------------------------------------------------------------------
def _orthogonal_linear(key, in_dim, out_dim, gain):
    """orthogonal_(weight, gain) on a (out,in) weight, returned as (in,out);
    bias = 0 (bias_const=0.0)."""
    w_out_in = jax.nn.initializers.orthogonal(scale=gain)(
        key, (out_dim, in_dim), jnp.float32)
    return jnp.transpose(w_out_in), jnp.zeros((1, out_dim), jnp.float32)


def init_params(key, in_size, action_dim, policy_hidden=64, value_hidden=64):
    out_size = action_dim * 2            # Box action space -> mean + std_logit
    ks = jax.random.split(key, 6)
    sqrt2 = float(jnp.sqrt(2.0))
    pw1, pb1 = _orthogonal_linear(ks[0], in_size, policy_hidden, sqrt2)
    pw2, pb2 = _orthogonal_linear(ks[1], policy_hidden, policy_hidden, sqrt2)
    pw3, pb3 = _orthogonal_linear(ks[2], policy_hidden, out_size, 0.01)
    vw1, vb1 = _orthogonal_linear(ks[3], in_size, value_hidden, sqrt2)
    vw2, vb2 = _orthogonal_linear(ks[4], value_hidden, value_hidden, sqrt2)
    vw3, vb3 = _orthogonal_linear(ks[5], value_hidden, 1, 1.0)
    return dict(pw1=pw1, pb1=pb1, pw2=pw2, pb2=pb2, pw3=pw3, pb3=pb3,
                vw1=vw1, vb1=vb1, vw2=vw2, vb2=vb2, vw3=vw3, vb3=vb3)


def fuse_params(params, action_dim):
    """Pre-fuse (once, outside the kernel) the 12 tiny arrays into 4 lane-dense
    arrays: W1 [D,WF], block-diagonal W2 [WF,WF], fused-head W3 [WF,WF] (all bf16
    for the MXU) and a packed f32 bias matrix B [3,WF]."""
    f32 = jnp.float32
    pw1, pw2, pw3 = params["pw1"], params["pw2"], params["pw3"]
    vw1, vw2, vw3 = params["vw1"], params["vw2"], params["vw3"]
    pb1, pb2, pb3 = params["pb1"], params["pb2"], params["pb3"]
    vb1, vb2, vb3 = params["vb1"], params["vb2"], params["vb3"]

    D, HP = pw1.shape
    HV = vw1.shape[1]
    A2 = 2 * action_dim
    WF = _round_up(max(HP + HV, A2 + 1), _LANE)      # 128 for defaults

    W1 = jnp.zeros((D, WF), f32).at[:, :HP].set(pw1).at[:, HP:HP + HV].set(vw1)
    W2 = (jnp.zeros((WF, WF), f32)
          .at[:HP, :HP].set(pw2)
          .at[HP:HP + HV, HP:HP + HV].set(vw2))       # zero cross-blocks
    W3 = (jnp.zeros((WF, WF), f32)
          .at[:HP, :A2].set(pw3)
          .at[HP:HP + HV, A2:A2 + 1].set(vw3))
    Bp = (jnp.zeros((3, WF), f32)
          .at[0, :HP].set(pb1[0]).at[0, HP:HP + HV].set(vb1[0])
          .at[1, :HP].set(pb2[0]).at[1, HP:HP + HV].set(vb2[0])
          .at[2, :A2].set(pb3[0]).at[2, A2:A2 + 1].set(vb3[0]))
    return dict(W1=W1.astype(jnp.bfloat16),
                W2=W2.astype(jnp.bfloat16),
                W3=W3.astype(jnp.bfloat16),
                B=Bp)


# ---------------------------------------------------------------------------
# Pure-JAX reference (unfused f32 params) for correctness check
# ---------------------------------------------------------------------------
def _reference_forward(state, params, action_dim):
    h = jnp.tanh(state @ params["pw1"] + params["pb1"])
    h = jnp.tanh(h @ params["pw2"] + params["pb2"])
    logits = h @ params["pw3"] + params["pb3"]
    mean = logits[:, :action_dim]
    std = jax.nn.softplus(logits[:, action_dim:]) + 0.05
    g = jnp.tanh(state @ params["vw1"] + params["vb1"])
    g = jnp.tanh(g @ params["vw2"] + params["vb2"])
    value = g @ params["vw3"] + params["vb3"]
    return mean, std, value


def _check(state, params, fused, action_dim):
    B = state.shape[0]
    mean, std, value = separate_feature_network_forward(state, fused, action_dim)
    jax.block_until_ready((mean, std, value))
    r_mean, r_std, r_value = _reference_forward(state, params, action_dim)
    assert mean.shape == (B, action_dim) and std.shape == (B, action_dim)
    assert value.shape == (B, 1)
    # bf16 MXU operands (f32 accumulation) -> loosened tolerance vs f32 reference.
    assert jnp.allclose(mean, r_mean, atol=5e-2, rtol=5e-2)
    assert jnp.allclose(std, r_std, atol=5e-2, rtol=5e-2)
    assert jnp.allclose(value, r_value, atol=5e-2, rtol=5e-2)
    assert bool(jnp.all(std > 0.05 - 1e-3))    # scale = softplus(.) + 0.05 > 0


if __name__ == "__main__":
    key = jax.random.PRNGKey(0)
    k_param, k_state = jax.random.split(key)

    IN_SIZE, ACTION_DIM = 16, 4                # Box action space with 4 dims
    params = init_params(k_param, IN_SIZE, ACTION_DIM)
    fused = fuse_params(params, ACTION_DIM)

    # Small batch (single grid step).
    state = jax.random.normal(k_state, (8, IN_SIZE), jnp.float32)
    _check(state, params, fused, ACTION_DIM)

    # Batch not divisible by the tile: exercises the >=2-step grid and the
    # ragged final block (no wrapper-side jnp.pad copy).
    state2 = jax.random.normal(jax.random.PRNGKey(1), (50, IN_SIZE), jnp.float32)
    _check(state2, params, fused, ACTION_DIM)

    # TODO(synk): the torch.distributions.Independent(Normal(...)) object itself
    # has no array equivalent; we return its (loc, scale) arrays instead.
    print("KERNEL_OK")
</pallas_src>

<mosaic_0001>
module attributes {stable_mosaic.version = 11 : i64} {
  func.func @_fused_kernel(%arg0: i32, %arg1: memref<8x16xf32, #tpu.memory_space<vmem>>, %arg2: memref<16x128xbf16, #tpu.memory_space<vmem>>, %arg3: memref<128x128xbf16, #tpu.memory_space<vmem>>, %arg4: memref<128x128xbf16, #tpu.memory_space<vmem>>, %arg5: memref<3x128xf32, #tpu.memory_space<vmem>>, %arg6: memref<8x128xf32, #tpu.memory_space<vmem>>) attributes {dimension_semantics = [#tpu.dimension_semantics<parallel>], iteration_bounds = array<i64: 1>, scalar_prefetch = 0 : i64, scratch_operands = 0 : i64, tpu.core_type = #tpu.core_type<tc>, window_params = [{transform_indices = @transform_0, window_bounds = array<i64: 8, 16>}, {pipeline_mode = #tpu.pipeline_mode<synchronous>, transform_indices = @transform_1, window_bounds = array<i64: 16, 128>}, {pipeline_mode = #tpu.pipeline_mode<synchronous>, transform_indices = @transform_2, window_bounds = array<i64: 128, 128>}, {pipeline_mode = #tpu.pipeline_mode<synchronous>, transform_indices = @transform_3, window_bounds = array<i64: 128, 128>}, {pipeline_mode = #tpu.pipeline_mode<synchronous>, transform_indices = @transform_4, window_bounds = array<i64: 3, 128>}, {transform_indices = @transform_5, window_bounds = array<i64: 8, 128>}]} {
    %c0 = arith.constant 0 : index
    %c0_0 = arith.constant 0 : index
    %0 = vector.load %arg1[%c0, %c0_0] : memref<8x16xf32, #tpu.memory_space<vmem>>, vector<8x16xf32>
    %1 = arith.truncf %0 : vector<8x16xf32> to vector<8x16xbf16>
    %c0_1 = arith.constant 0 : index
    %c0_2 = arith.constant 0 : index
    %2 = vector.load %arg5[%c0_1, %c0_2] : memref<3x128xf32, #tpu.memory_space<vmem>>, vector<3x128xf32>
    %c0_3 = arith.constant 0 : index
    %c0_4 = arith.constant 0 : index
    %3 = vector.load %arg2[%c0_3, %c0_4] : memref<16x128xbf16, #tpu.memory_space<vmem>>, vector<16x128xbf16>
    %cst = arith.constant dense<0.000000e+00> : vector<8x128xf32>
    %4 = tpu.matmul %1, %3, %cst {dimension_numbers = #tpu.dot_dimension_numbers<[1], [0], [0], [1], [0, 0, 1, 1], [], []>} : vector<8x16xbf16>, vector<16x128xbf16>, vector<8x128xf32> -> vector<8x128xf32>
    %5 = vector.extract_strided_slice %2 {offsets = [0, 0], sizes = [1, 128], strides = [1, 1]} : vector<3x128xf32> to vector<1x128xf32>
    %6 = vector.broadcast %5 : vector<1x128xf32> to vector<8x128xf32>
    %7 = arith.addf %4, %6 : vector<8x128xf32>
    %8 = math.tanh %7 : vector<8x128xf32>
    %9 = arith.truncf %8 : vector<8x128xf32> to vector<8x128xbf16>
    %c0_5 = arith.constant 0 : index
    %c0_6 = arith.constant 0 : index
    %10 = vector.load %arg3[%c0_5, %c0_6] : memref<128x128xbf16, #tpu.memory_space<vmem>>, vector<128x128xbf16>
    %cst_7 = arith.constant dense<0.000000e+00> : vector<8x128xf32>
    %11 = tpu.matmul %9, %10, %cst_7 {dimension_numbers = #tpu.dot_dimension_numbers<[1], [0], [0], [1], [0, 0, 1, 1], [], []>} : vector<8x128xbf16>, vector<128x128xbf16>, vector<8x128xf32> -> vector<8x128xf32>
    %12 = vector.extract_strided_slice %2 {offsets = [1, 0], sizes = [1, 128], strides = [1, 1]} : vector<3x128xf32> to vector<1x128xf32>
    %13 = vector.broadcast %12 : vector<1x128xf32> to vector<8x128xf32>
    %14 = arith.addf %11, %13 : vector<8x128xf32>
    %15 = math.tanh %14 : vector<8x128xf32>
    %16 = arith.truncf %15 : vector<8x128xf32> to vector<8x128xbf16>
    %c0_8 = arith.constant 0 : index
    %c0_9 = arith.constant 0 : index
    %17 = vector.load %arg4[%c0_8, %c0_9] : memref<128x128xbf16, #tpu.memory_space<vmem>>, vector<128x128xbf16>
    %cst_10 = arith.constant dense<0.000000e+00> : vector<8x128xf32>
    %18 = tpu.matmul %16, %17, %cst_10 {dimension_numbers = #tpu.dot_dimension_numbers<[1], [0], [0], [1], [0, 0, 1, 1], [], []>} : vector<8x128xbf16>, vector<128x128xbf16>, vector<8x128xf32> -> vector<8x128xf32>
    %19 = vector.extract_strided_slice %2 {offsets = [2, 0], sizes = [1, 128], strides = [1, 1]} : vector<3x128xf32> to vector<1x128xf32>
    %20 = vector.broadcast %19 : vector<1x128xf32> to vector<8x128xf32>
    %21 = arith.addf %18, %20 : vector<8x128xf32>
    %22 = tpu.iota {dimensions = array<i32: 1>} : vector<8x128xi32>
    %c4_i32 = arith.constant 4 : i32
    %23 = vector.broadcast %c4_i32 : i32 to vector<8x128xi32>
    %24 = arith.cmpi sge, %22, %23 : vector<8x128xi32>
    %c8_i32 = arith.constant 8 : i32
    %25 = vector.broadcast %c8_i32 : i32 to vector<8x128xi32>
    %26 = arith.cmpi slt, %22, %25 : vector<8x128xi32>
    %27 = arith.andi %24, %26 : vector<8x128xi1>
    %cst_11 = arith.constant 0.000000e+00 : f32
    %28 = vector.broadcast %cst_11 : f32 to vector<8x128xf32>
    %29 = arith.maximumf %21, %28 : vector<8x128xf32>
    %30 = math.absf %21 : vector<8x128xf32>
    %cst_12 = arith.constant 0.000000e+00 : f32
    %31 = vector.broadcast %cst_12 : f32 to vector<8x128xf32>
    %32 = arith.subf %31, %30 : vector<8x128xf32>
    %33 = math.exp %32 : vector<8x128xf32>
    %34 = math.log1p %33 : vector<8x128xf32>
    %35 = arith.addf %29, %34 : vector<8x128xf32>
    %cst_13 = arith.constant 5.000000e-02 : f32
    %36 = vector.broadcast %cst_13 : f32 to vector<8x128xf32>
    %37 = arith.addf %35, %36 : vector<8x128xf32>
    %38 = arith.select %27, %37, %21 : vector<8x128xi1>, vector<8x128xf32>
    %c0_14 = arith.constant 0 : index
    %c0_15 = arith.constant 0 : index
    %39 = vector.load %arg6[%c0_14, %c0_15] : memref<8x128xf32, #tpu.memory_space<vmem>>, vector<8x128xf32>
    tpu.vector_store %arg6[%c0_14, %c0_15], %38 {strides = array<i32>} : memref<8x128xf32, #tpu.memory_space<vmem>>, vector<8x128xf32>,
    return
  }
  func.func @transform_0(%arg0: i32) -> (i32, i32) {
    %c0_i32 = arith.constant 0 : i32
    %c0_i32_0 = arith.constant 0 : i32
    return %arg0, %c0_i32 : i32, i32
  }
  func.func @transform_1(%arg0: i32) -> (i32, i32) {
    %c0_i32 = arith.constant 0 : i32
    %c0_i32_0 = arith.constant 0 : i32
    %c0_i32_1 = arith.constant 0 : i32
    return %c0_i32, %c0_i32_0 : i32, i32
  }
  func.func @transform_2(%arg0: i32) -> (i32, i32) {
    %c0_i32 = arith.constant 0 : i32
    %c0_i32_0 = arith.constant 0 : i32
    %c0_i32_1 = arith.constant 0 : i32
    return %c0_i32, %c0_i32_0 : i32, i32
  }
  func.func @transform_3(%arg0: i32) -> (i32, i32) {
    %c0_i32 = arith.constant 0 : i32
    %c0_i32_0 = arith.constant 0 : i32
    %c0_i32_1 = arith.constant 0 : i32
    return %c0_i32, %c0_i32_0 : i32, i32
  }
  func.func @transform_4(%arg0: i32) -> (i32, i32) {
    %c0_i32 = arith.constant 0 : i32
    %c0_i32_0 = arith.constant 0 : i32
    %c0_i32_1 = arith.constant 0 : i32
    return %c0_i32, %c0_i32_0 : i32, i32
  }
  func.func @transform_5(%arg0: i32) -> (i32, i32) {
    %c0_i32 = arith.constant 0 : i32
    %c0_i32_0 = arith.constant 0 : i32
    return %arg0, %c0_i32 : i32, i32
  }
}

</mosaic_0001>

<llo_original>
// kernel: tpu_custom_call.1
$region0: #{tpu_custom_call.1}
  #allocation0 [shape = 'u32[]', space=smem, size = 0x4, offset = 0x4, fixed_abs, tag = 'smem constant byte address 0x4 - core index']
  #allocation1 [shape = 'u32[72,128]{1,0:T(1,128)}', space=vmem, size = 0x9000, scoped, tag = 'internal scratch']
  %s0 = inlined_call_operand.hbm [shape: f32[8,16], index: 0, kind: input, shape index: {}]
  %s1 = inlined_call_operand.hbm [shape: bf16[16,128], index: 1, kind: input, shape index: {}]
  %s2 = inlined_call_operand.hbm [shape: bf16[128,128], index: 2, kind: input, shape index: {}]
  %s3 = inlined_call_operand.hbm [shape: bf16[128,128], index: 3, kind: input, shape index: {}]
  %s4 = inlined_call_operand.hbm [shape: f32[3,128], index: 4, kind: input, shape index: {}]
  %s5 = inlined_call_operand.hbm [shape: f32[8,128], index: 5, kind: output, shape index: {}]
  %s6 = sld [smem:[#allocation0]]
  $region50: #{tpu_custom_call.1} parent=0
    _
  %s8 = ssub.s32 1, %s6
  %s9 = scalar_select 0, %s8, %s6
  $region1: #{tpu_custom_call.1} parent=0
    #allocation2 [shape = 'u8[4096]{0}', space=vmem, size = 0x1000, scoped, tag = 'input window, operand 0, single buffered']
    #allocation3 [shape = 's32[1]{0}', space=sflag, size = 0x4, scoped, tag = 'scoped memory for tpu_custom_call.1']
    #allocation4 [shape = 's32[1]{0}', space=sflag, size = 0x4, scoped, tag = 'scoped memory for tpu_custom_call.1']
    #allocation5 [shape = 'u8[4096]{0}', space=vmem, size = 0x1000, scoped, tag = 'input window, operand 1, single buffered']
    #allocation6 [shape = 's32[1]{0}', space=sflag, size = 0x4, scoped, tag = 'scoped memory for tpu_custom_call.1']
    #allocation7 [shape = 'u8[32768]{0}', space=vmem, size = 0x8000, scoped, tag = 'input window, operand 2, single buffered']
    #allocation8 [shape = 'u8[32768]{0}', space=vmem, size = 0x8000, scoped, tag = 'input window, operand 3, single buffered']
    #allocation9 [shape = 's32[1]{0}', space=sflag, size = 0x4, scoped, tag = 'scoped memory for tpu_custom_call.1']
    #allocation10 [shape = 'u8[2048]{0}', space=vmem, size = 0x800, scoped, tag = 'input window, operand 4, single buffered']
    #allocation11 [shape = 'u8[4096]{0}', space=vmem, size = 0x1000, scoped, tag = 'output window, operand 0, single buffered']
    %10 = vsyncpa [#allocation3], 0
    %11 = vsyncpa [#allocation6], 0
    %12 = vsyncpa [#allocation9], 0
    %13 = vsyncpa [#allocation4], 0
    // Predicated region
    $region2: #{tpu_custom_call.1} parent=1 // pred_check
      _
    $region3: #{tpu_custom_call.1} parent=1 // pred_check_branch
      %15 = sbr.rel (0) target = $region5
    $region4: #{tpu_custom_call.1} parent=1 // pred_region
      %17 = vsyncadd [#allocation3], 0
      %s19 = sshll.u32 %s0, 4
      %s20 = int_to_ptr.hbm [resolvable:$true] %s19
      %s21 = sshll.u32 [#allocation2], 4
      %s22 = int_to_ptr.vmem [resolvable:$true] %s21
      %24 = dma.hbm_to_vmem [thread:$0]  %s20, 128, %s22, [#allocation3]
    $region5: #{tpu_custom_call.1} parent=1 // pred_fallthru
      _
    // Predicated region
    $region6: #{tpu_custom_call.1} parent=1 // pred_check
      _
    $region7: #{tpu_custom_call.1} parent=1 // pred_check_branch
      %26 = sbr.rel (0) target = $region9
    $region8: #{tpu_custom_call.1} parent=1 // pred_region
      %28 = vsyncadd [#allocation6], 0
      %s29 = sshll.u32 %s1, 4
      %s30 = int_to_ptr.hbm [resolvable:$true] %s29
      %s31 = sshll.u32 [#allocation5], 4
      %s32 = int_to_ptr.vmem [resolvable:$true] %s31
      %37 = dma.hbm_to_vmem [thread:$0]  %s30, 128, %s32, [#allocation6], 64, 64, 4
    $region9: #{tpu_custom_call.1} parent=1 // pred_fallthru
      _
    // Predicated region
    $region10: #{tpu_custom_call.1} parent=1 // pred_check
      _
    $region11: #{tpu_custom_call.1} parent=1 // pred_check_branch
      %39 = sbr.rel (0) target = $region13
    $region12: #{tpu_custom_call.1} parent=1 // pred_region
      %41 = vsyncadd [#allocation6], 0
      %s42 = sshll.u32 %s2, 4
      %s43 = int_to_ptr.hbm [resolvable:$true] %s42
      %s44 = sshll.u32 [#allocation7], 4
      %s45 = int_to_ptr.vmem [resolvable:$true] %s44
      %50 = dma.hbm_to_vmem [thread:$0]  %s43, 1024, %s45, [#allocation6], 64, 64, 4
    $region13: #{tpu_custom_call.1} parent=1 // pred_fallthru
      _
    // Predicated region
    $region14: #{tpu_custom_call.1} parent=1 // pred_check
      _
    $region15: #{tpu_custom_call.1} parent=1 // pred_check_branch
      %52 = sbr.rel (0) target = $region17
    $region16: #{tpu_custom_call.1} parent=1 // pred_region
      %54 = vsyncadd [#allocation9], 0
      %s55 = sshll.u32 %s3, 4
      %s56 = int_to_ptr.hbm [resolvable:$true] %s55
      %s57 = sshll.u32 [#allocation8], 4
      %s58 = int_to_ptr.vmem [resolvable:$true] %s57
      %63 = dma.hbm_to_vmem [thread:$0]  %s56, 1024, %s58, [#allocation9], 64, 64, 4
    $region17: #{tpu_custom_call.1} parent=1 // pred_fallthru
      _
    // Predicated region
    $region18: #{tpu_custom_call.1} parent=1 // pred_check
      _
    $region19: #{tpu_custom_call.1} parent=1 // pred_check_branch
      %65 = sbr.rel (0) target = $region21
    $region20: #{tpu_custom_call.1} parent=1 // pred_region
      %67 = vsyncadd [#allocation9], 0
      %s69 = sshll.u32 %s4, 4
      %s70 = int_to_ptr.hbm [resolvable:$true] %s69
      %s71 = sshll.u32 [#allocation10], 4
      %s72 = int_to_ptr.vmem [resolvable:$true] %s71
      %74 = dma.hbm_to_vmem [thread:$0]  %s70, 64, %s72, [#allocation9]
    $region21: #{tpu_custom_call.1} parent=1 // pred_fallthru
      _
    // Predicated region
    $region22: #{tpu_custom_call.1} parent=1 // pred_check
      _
    $region23: #{tpu_custom_call.1} parent=1 // pred_check_branch
      %76 = sbr.rel (0) target = $region25
    $region24: #{tpu_custom_call.1} parent=1 // pred_region
      %78 = dma.done [#allocation3], 128
    $region25: #{tpu_custom_call.1} parent=1 // pred_fallthru
      _
    // Predicated region
    $region26: #{tpu_custom_call.1} parent=1 // pred_check
      _
    $region27: #{tpu_custom_call.1} parent=1 // pred_check_branch
      %80 = sbr.rel (0) target = $region29
    $region28: #{tpu_custom_call.1} parent=1 // pred_region
      %82 = dma.done [#allocation6], 128
    $region29: #{tpu_custom_call.1} parent=1 // pred_fallthru
      _
    // Predicated region
    $region30: #{tpu_custom_call.1} parent=1 // pred_check
      _
    $region31: #{tpu_custom_call.1} parent=1 // pred_check_branch
      %84 = sbr.rel (0) target = $region33
    $region32: #{tpu_custom_call.1} parent=1 // pred_region
      %86 = dma.done [#allocation6], 1024
    $region33: #{tpu_custom_call.1} parent=1 // pred_fallthru
      _
    // Predicated region
    $region34: #{tpu_custom_call.1} parent=1 // pred_check
      _
    $region35: #{tpu_custom_call.1} parent=1 // pred_check_branch
      %88 = sbr.rel (0) target = $region37
    $region36: #{tpu_custom_call.1} parent=1 // pred_region
      %90 = dma.done [#allocation9], 1024
    $region37: #{tpu_custom_call.1} parent=1 // pred_fallthru
      _
    // Predicated region
    $region38: #{tpu_custom_call.1} parent=1 // pred_check
      _
    $region39: #{tpu_custom_call.1} parent=1 // pred_check_branch
      %92 = sbr.rel (0) target = $region41
    $region40: #{tpu_custom_call.1} parent=1 // pred_region
      %94 = dma.done [#allocation9], 64
    $region41: #{tpu_custom_call.1} parent=1 // pred_fallthru
      _
    %v96 = vld [vmem:[#allocation2] sm:$0xff]
    %v97 = vpack.c.bf16 %v96, %v96
    %v98 = vld [vmem:[#allocation10] sm:$0x7]
    %v99 = vld [vmem:[#allocation5] sm:$0xf]
    %v100 = vld [vmem:[#allocation5 + $0x4] sm:$0xf]
    %v101 = vperm.slane %v98, 0
    %v104 = vunpack.c.l.b16 %v99
    %v105 = vunpack.c.l.b16 %v100
    %v106 = vpack.c.b16 %v105, %v104
    %vm108 = vcmask 130048
    %v110 = vsel %vm108, %v97, 0
    %112 = vmatpush.bf16.msra.mxu0 0
    %113 = vmatpush.bf16.msra.mxu0 0
    %114 = vmatpush.bf16.msra.mxu0 0
    %115 = vmatpush.bf16.msra.mxu0 0
    %116 = vmatpush.bf16.msra.mxu0 0
    %117 = vmatpush.bf16.msra.mxu0 0
    %118 = vmatpush.bf16.msra.mxu0 0
    %119 = vmatpush.bf16.msra.mxu0 %v106
    %120 = vmatmul.bf16.gmra.mxu0 %v110
    %v121 = vpop.f32.mrf.mxu0
    %v122 = vadd.f32 %v101, %v121
    %v123 = vpop.f32.mrf.mxu0
    %124 = vdwg.mxu0
    %v125 = vtanh.pop %v122
    %v126 = vpack.c.bf16 %v125, %v125
    %v127 = vld [vmem:[#allocation7] sm:$0xf]
    %v128 = vld [vmem:[#allocation7 + $0x4] sm:$0xf]
    %v129 = vld [vmem:[#allocation7 + $0x8] sm:$0xf]
    %v130 = vld [vmem:[#allocation7 + $0xc] sm:$0xf]
    %v131 = vld [vmem:[#allocation7 + $0x10] sm:$0xf]
    %v132 = vld [vmem:[#allocation7 + $0x14] sm:$0xf]
    %v133 = vld [vmem:[#allocation7 + $0x18] sm:$0xf]
    %v134 = vld [vmem:[#allocation7 + $0x1c] sm:$0xf]
    %v135 = vld [vmem:[#allocation7 + $0x20] sm:$0xf]
    %v136 = vld [vmem:[#allocation7 + $0x24] sm:$0xf]
    %v137 = vld [vmem:[#allocation7 + $0x28] sm:$0xf]
    %v138 = vld [vmem:[#allocation7 + $0x2c] sm:$0xf]
    %v139 = vld [vmem:[#allocation7 + $0x30] sm:$0xf]
    %v140 = vld [vmem:[#allocation7 + $0x34] sm:$0xf]
    %v141 = vld [vmem:[#allocation7 + $0x38] sm:$0xf]
    %v142 = vld [vmem:[#allocation7 + $0x3c] sm:$0xf]
    %v143 = vperm.slane %v98, 1
    %v160 = vunpack.c.l.b16 %v127
    %v161 = vunpack.c.l.b16 %v128
    %v162 = vunpack.c.l.b16 %v129
    %v163 = vunpack.c.l.b16 %v130
    %v164 = vunpack.c.l.b16 %v131
    %v165 = vunpack.c.l.b16 %v132
    %v166 = vunpack.c.l.b16 %v133
    %v167 = vunpack.c.l.b16 %v134
    %v168 = vunpack.c.l.b16 %v135
    %v169 = vunpack.c.l.b16 %v136
    %v170 = vunpack.c.l.b16 %v137
    %v171 = vunpack.c.l.b16 %v138
    %v172 = vunpack.c.l.b16 %v139
    %v173 = vunpack.c.l.b16 %v140
    %v174 = vunpack.c.l.b16 %v141
    %v175 = vunpack.c.l.b16 %v142
    %v176 = vpack.c.b16 %v161, %v160
    %v177 = vpack.c.b16 %v163, %v162
    %v178 = vpack.c.b16 %v165, %v164
    %v179 = vpack.c.b16 %v167, %v166
    %v180 = vpack.c.b16 %v169, %v168
    %v181 = vpack.c.b16 %v171, %v170
    %v182 = vpack.c.b16 %v173, %v172
    %v183 = vpack.c.b16 %v175, %v174
    %192 = vmatpush.bf16.msra.mxu0 %v183
    %193 = vmatpush.bf16.msra.mxu0 %v182
    %194 = vmatpush.bf16.msra.mxu0 %v181
    %195 = vmatpush.bf16.msra.mxu0 %v180
    %196 = vmatpush.bf16.msra.mxu0 %v179
    %197 = vmatpush.bf16.msra.mxu0 %v178
    %198 = vmatpush.bf16.msra.mxu0 %v177
    %199 = vmatpush.bf16.msra.mxu0 %v176
    %200 = vmatmul.bf16.gmra.mxu0 %v126
    %v201 = vpop.f32.mrf.mxu0
    %v202 = vadd.f32 %v143, %v201
    %v203 = vpop.f32.mrf.mxu0
    %204 = vdwg.mxu0
    %v205 = vtanh.pop %v202
    %v206 = vpack.c.bf16 %v205, %v205
    %v207 = vld [vmem:[#allocation8] sm:$0xf]
    %v208 = vld [vmem:[#allocation8 + $0x4] sm:$0xf]
    %v209 = vld [vmem:[#allocation8 + $0x8] sm:$0xf]
    %v210 = vld [vmem:[#allocation8 + $0xc] sm:$0xf]
    %v211 = vld [vmem:[#allocation8 + $0x10] sm:$0xf]
    %v212 = vld [vmem:[#allocation8 + $0x14] sm:$0xf]
    %v213 = vld [vmem:[#allocation8 + $0x18] sm:$0xf]
    %v214 = vld [vmem:[#allocation8 + $0x1c] sm:$0xf]
    %v215 = vld [vmem:[#allocation8 + $0x20] sm:$0xf]
    %v216 = vld [vmem:[#allocation8 + $0x24] sm:$0xf]
    %v217 = vld [vmem:[#allocation8 + $0x28] sm:$0xf]
    %v218 = vld [vmem:[#allocation8 + $0x2c] sm:$0xf]
    %v219 = vld [vmem:[#allocation8 + $0x30] sm:$0xf]
    %v220 = vld [vmem:[#allocation8 + $0x34] sm:$0xf]
    %v221 = vld [vmem:[#allocation8 + $0x38] sm:$0xf]
    %v222 = vld [vmem:[#allocation8 + $0x3c] sm:$0xf]
    %v223 = vperm.slane %v98, 2
    %v240 = vunpack.c.l.b16 %v207
    %v241 = vunpack.c.l.b16 %v208
    %v242 = vunpack.c.l.b16 %v209
    %v243 = vunpack.c.l.b16 %v210
    %v244 = vunpack.c.l.b16 %v211
    %v245 = vunpack.c.l.b16 %v212
    %v246 = vunpack.c.l.b16 %v213
    %v247 = vunpack.c.l.b16 %v214
    %v248 = vunpack.c.l.b16 %v215
    %v249 = vunpack.c.l.b16 %v216
    %v250 = vunpack.c.l.b16 %v217
    %v251 = vunpack.c.l.b16 %v218
    %v252 = vunpack.c.l.b16 %v219
    %v253 = vunpack.c.l.b16 %v220
    %v254 = vunpack.c.l.b16 %v221
    %v255 = vunpack.c.l.b16 %v222
    %v256 = vpack.c.b16 %v241, %v240
    %v257 = vpack.c.b16 %v243, %v242
    %v258 = vpack.c.b16 %v245, %v244
    %v259 = vpack.c.b16 %v247, %v246
    %v260 = vpack.c.b16 %v249, %v248
    %v261 = vpack.c.b16 %v251, %v250
    %v262 = vpack.c.b16 %v253, %v252
    %v263 = vpack.c.b16 %v255, %v254
    %272 = vmatpush.bf16.msra.mxu0 %v263
    %273 = vmatpush.bf16.msra.mxu0 %v262
    %274 = vmatpush.bf16.msra.mxu0 %v261
    %275 = vmatpush.bf16.msra.mxu0 %v260
    %276 = vmatpush.bf16.msra.mxu0 %v259
    %277 = vmatpush.bf16.msra.mxu0 %v258
    %278 = vmatpush.bf16.msra.mxu0 %v257
    %279 = vmatpush.bf16.msra.mxu0 %v256
    %280 = vmatmul.bf16.gmra.mxu0 %v206
    %v281 = vpop.f32.mrf.mxu0
    %v282 = vadd.f32 %v223, %v281
    %v283 = vpop.f32.mrf.mxu0
    %284 = vdwg.mxu0
    %v285 = vlaneseq
    %v286 = vand.u32 %v285, 127
    %vm287 = vcmp.ge.s32.totalorder %v286, 4
    %vm288 = vcmp.lt.s32.totalorder %v286, 8
    %vm289 = vmand %vm287, %vm288
    %v290 = vmax.f32 %v282, 0.0
    %v291 = vand.u32 2147483647, %v282
    %v292 = vsub.f32 0.0, %v291
    %v293 = vmul.f32 %v292, 1.442695
    %v294 = vpow.pop %v293
    %v295 = vadd.f32 %v294, 1.0
    %v296 = vlog2.pop %v295
    %v297 = vmul.f32 %v296, 0.6931472
    %v298 = vmul.f32 -0.5, %v294
    %v299 = vadd.f32 %v298, 1.0
    %v300 = vmul.f32 %v299, %v294
    %v301 = vand.u32 2147483647, %v294
    %vm302 = vcmp.lt.f32.partialorder %v301, 0.0004427343
    %v303 = vsel %vm302, %v300, %v297
    %v304 = vadd.f32 %v290, %v303
    %v305 = vadd.f32 %v304, 0.05
    %v306 = vsel %vm289, %v305, %v282
    %307 = vst [vmem:[#allocation11] sm:$0xff] %v306
    // Predicated region
    $region42: #{tpu_custom_call.1} parent=1 // pred_check
      _
    $region43: #{tpu_custom_call.1} parent=1 // pred_check_branch
      %309 = sbr.rel (0) target = $region45
    $region44: #{tpu_custom_call.1} parent=1 // pred_region
      %311 = vsyncadd [#allocation4], 0
      %s313 = sshll.u32 [#allocation11], 4
      %s314 = int_to_ptr.vmem [resolvable:$true] %s313
      %s315 = sshll.u32 %s5, 4
      %s316 = int_to_ptr.hbm [resolvable:$true] %s315
      %318 = dma.vmem_to_hbm [thread:$0]  %s314, 128, %s316, [#allocation4]
    $region45: #{tpu_custom_call.1} parent=1 // pred_fallthru
      _
    // Predicated region
    $region46: #{tpu_custom_call.1} parent=1 // pred_check
      _
    $region47: #{tpu_custom_call.1} parent=1 // pred_check_branch
      %320 = sbr.rel (0) target = $region49
    $region48: #{tpu_custom_call.1} parent=1 // pred_region
      %322 = dma.done [#allocation4], 128
    $region49: #{tpu_custom_call.1} parent=1 // pred_fallthru
      _
    %323 = vsyncpa [#allocation3], 1
    %324 = vsyncpa [#allocation6], 1
    %325 = vsyncpa [#allocation9], 1
    %326 = vsyncpa [#allocation4], 1

</llo_original>
